<compile_context>
chip_gen: v6e
topology: v6e:2x2x1
jax: 0.10.0
libtpu: 0.0.40
codegen_flags: <defaults>
</compile_context>

<pallas_src>
import math

import jax
import jax.numpy as jnp
from jax.experimental import pallas as pl
from jax.experimental.pallas import tpu as pltpu


KERNEL_SIZE = 5          # module default used in the self-test
SIGMA_INIT = 1.0
CHANNELS = 3


def _round_up(x, m):
    return ((x + m - 1) // m) * m


def _cdiv(a, b):
    return -(-a // b)


def _gaussian_kernel(size, sigma):
    """Matches LearnableGaussianSmoothing._gaussian_kernel."""
    x = jnp.arange(size, dtype=jnp.float32)
    k = jnp.exp(-((x - size // 2) ** 2) / (2.0 * sigma ** 2))
    return k / jnp.sum(k)


def _build_halo(x_flat, lane_tile, num_tiles, ctx):
    """Vectorized per-lane-tile boundary context.

    Returns (B, num_tiles * 2*ctx); tile i's slice holds
    [ctx columns preceding the tile | ctx columns following the tile],
    zero-filled outside the valid sequence.  Two slice/concat ops total
    (no Python loop over tiles); wrapper HBM traffic stays O(N * 2*ctx/lane_tile).
    """
    B, N = x_flat.shape
    n_pad = num_tiles * lane_tile
    xp = x_flat if n_pad == N else jnp.pad(x_flat, ((0, 0), (0, n_pad - N)))
    xt = xp.reshape(B, num_tiles, lane_tile)
    z = jnp.zeros((B, 1, ctx), x_flat.dtype)
    left = jnp.concatenate([z, xt[:, :-1, lane_tile - ctx:]], axis=1)   # (B,T,ctx)
    right = jnp.concatenate([xt[:, 1:, :ctx], z], axis=1)               # (B,T,ctx)
    return jnp.concatenate([left, right], axis=2).reshape(B, num_tiles * 2 * ctx)


def _vmem_cap_bytes():
    try:
        return int(pltpu.get_tpu_info().vmem_capacity_bytes)
    except Exception:
        return 64 * 1024 * 1024      # assume the tightest generation (v7x per-TC)


def learnable_gaussian_smoothing(x, kernel_weights, *,
                                 max_lane_tile=131072,
                                 target_block_bytes=4 * 1024 * 1024):
    """Forward pass of LearnableGaussianSmoothing.

    x:              (B, L, C) or (L, C), C=3 for the module; float32 preferred
                    (other dtypes are upcast to f32 in-kernel).
    kernel_weights: the module's depthwise filter - (C, 1, K), (C, K) or (1, K)/(K,).
                    Per-channel taps are fully supported (rows may differ).
    returns:        (B, L, C)   (2-D input is unsqueezed, as in the module)
    """
    if x.ndim != 3:
        x = x[None, ...]
    B, L, C = x.shape
    itemsize = jnp.dtype(x.dtype).itemsize

    kw = jnp.asarray(kernel_weights, jnp.float32)
    K = int(kw.shape[-1])
    kw2 = kw.reshape(-1, K)
    w_ck = kw2 if kw2.shape[0] == C else jnp.broadcast_to(kw2[:1], (C, K))  # (C, K)

    # PyTorch padding='same' (cross-correlation): left = (K-1)//2, rest on the right.
    pad_l = (K - 1) // 2
    pad_r = (K - 1) - pad_l
    N = L * C

    # ---- tiling ---------------------------------------------------------
    lcm = (128 * C) // math.gcd(128, C)                  # lane tile granularity (384 for C=3)
    ctx = _round_up(max(max(pad_l, pad_r) * C, 1), 128)  # per-side halo, 128-aligned

    n128 = _round_up(N, 128)
    if n128 <= max(max_lane_tile, ctx):
        lane_tile = max(n128, ctx)                       # single lane tile per row
    else:
        lane_tile = max((max_lane_tile // lcm) * lcm, _round_up(ctx, lcm))
    num_lane_tiles = _cdiv(N, lane_tile)

    # Rows: grow the block toward the byte target (review: 2-4 MiB blocks).
    tgt_rows = max(8, target_block_bytes // (lane_tile * itemsize))
    row_tile = min(_round_up(B, 8), _round_up(tgt_rows, 8))
    num_row_tiles = _cdiv(B, row_tile)

    # v7x megacore: avoid a single-step grid for non-trivial problem sizes.
    if num_row_tiles * num_lane_tiles == 1:
        if _round_up(B, 8) >= 16:
            row_tile = _round_up(_cdiv(B, 2), 8)
            num_row_tiles = _cdiv(B, row_tile)
        elif N > 8 * lcm:
            lane_tile = max(_round_up(_cdiv(N, 2), lcm), _round_up(ctx, lcm))
            num_lane_tiles = _cdiv(N, lane_tile)

    rem = N - (num_lane_tiles - 1) * lane_tile           # valid lanes in the last tile

    # ---- wrapper-side small sidecars -------------------------------------
    x_flat = x.reshape(B, N)                             # pure reshape - no transpose
    halo = _build_halo(x_flat, lane_tile, num_lane_tiles, ctx)
    # Per-lane taps: value at lane p of any tile is w[p % C, k] (tile starts are
    # multiples of C by construction; single-tile case starts at 0).
    reps = _cdiv(lane_tile, C)
    w_lane = jnp.tile(jnp.transpose(w_ck), (1, reps))[:, :lane_tile]     # (K, lane_tile)

    # ---- kernel -----------------------------------------------------------
    def kernel(x_ref, halo_ref, w_ref, o_ref, win_ref):
        # Assemble the haloed window in VMEM scratch with three 128-aligned stores.
        win_ref[:, pl.ds(0, ctx)] = halo_ref[:, :ctx].astype(jnp.float32)
        win_ref[:, pl.ds(ctx, lane_tile)] = x_ref[...].astype(jnp.float32)
        win_ref[:, pl.ds(ctx + lane_tile, ctx)] = halo_ref[:, ctx:].astype(jnp.float32)

        # Only the (partial) last lane tile needs 'same'-padding zeros after the
        # valid data; steady-state tiles pay nothing (review item: gate with pl.when).
        if rem < lane_tile and pad_r > 0:
            zero_w = min(lane_tile - rem, pad_r * C)

            @pl.when(pl.program_id(1) == num_lane_tiles - 1)
            def _():
                win_ref[:, pl.ds(ctx + rem, zero_w)] = jnp.zeros(
                    (row_tile, zero_w), jnp.float32)

        acc = None
        for k in range(K):                               # K static -> unrolled MACs
            off = ctx + (k - pad_l) * C                  # static lane offset
            # Ref-level slice: offset load (XLU lane shift), no value-level copy.
            term = w_ref[pl.ds(k, 1), :] * win_ref[:, pl.ds(off, lane_tile)]
            acc = term if acc is None else acc + term
        o_ref[...] = acc.astype(o_ref.dtype)             # lane-dense store

    # ---- VMEM budget & cost hint ------------------------------------------
    in_b = row_tile * lane_tile * itemsize
    out_b = row_tile * lane_tile * itemsize
    halo_b = row_tile * 2 * ctx * itemsize
    w_b = K * lane_tile * 4
    scratch_b = row_tile * (lane_tile + 2 * ctx) * 4
    vmem_need = 2 * (in_b + out_b + halo_b + w_b) + scratch_b
    vmem_cap = _vmem_cap_bytes()
    vmem_limit = min(vmem_need + (8 << 20), (vmem_cap * 3) // 4)
    vmem_limit = int(max(vmem_limit, vmem_need + (1 << 20)))

    cost = pl.CostEstimate(
        flops=2 * K * B * N,
        transcendentals=0,
        bytes_accessed=(2 * B * N + B * num_lane_tiles * 2 * ctx) * itemsize
                       + K * lane_tile * 4,
    )

    out_flat = pl.pallas_call(
        kernel,
        out_shape=jax.ShapeDtypeStruct((B, N), x.dtype),
        grid=(num_row_tiles, num_lane_tiles),
        in_specs=[
            pl.BlockSpec((row_tile, lane_tile), lambda b, i: (b, i)),     # x
            pl.BlockSpec((row_tile, 2 * ctx), lambda b, i: (b, i)),       # halo sidecar
            pl.BlockSpec((K, lane_tile), lambda b, i: (0, 0)),            # per-lane taps
        ],
        out_specs=pl.BlockSpec((row_tile, lane_tile), lambda b, i: (b, i)),
        scratch_shapes=[pltpu.VMEM((row_tile, lane_tile + 2 * ctx), jnp.float32)],
        compiler_params=pltpu.CompilerParams(
            dimension_semantics=("parallel", "parallel"),
            vmem_limit_bytes=vmem_limit),
        cost_estimate=cost,
    )(x_flat, halo, w_lane)

    return out_flat.reshape(B, L, C)


def _reference(x, kernel_weights):
    """Plain-JAX depthwise 'same' cross-correlation with full per-channel taps."""
    if x.ndim != 3:
        x = x[None, ...]
    B, L, C = x.shape
    w = jnp.asarray(kernel_weights, jnp.float32).reshape(-1, jnp.asarray(kernel_weights).shape[-1])
    if w.shape[0] != C:
        w = jnp.broadcast_to(w[:1], (C, w.shape[-1]))
    K = w.shape[-1]
    pad_l = (K - 1) // 2
    pad_r = (K - 1) - pad_l
    xt = jnp.transpose(x, (0, 2, 1)).astype(jnp.float32)            # (B, C, L)
    xp = jnp.pad(xt, ((0, 0), (0, 0), (pad_l, pad_r)))
    y = jnp.zeros((B, C, L), jnp.float32)
    for k in range(K):
        y = y + xp[:, :, k:k + L] * w[:, k][None, :, None]
    return jnp.transpose(y, (0, 2, 1)).astype(x.dtype)


if __name__ == "__main__":
    key = jax.random.PRNGKey(0)

    # Parameter init mirrors __init__: sigma=1.0 Gaussian expanded to (3, 1, K).
    g = _gaussian_kernel(KERNEL_SIZE, jnp.float32(SIGMA_INIT))                # (K,)
    module_kernel = jnp.broadcast_to(g[None, None, :], (CHANNELS, 1, KERNEL_SIZE))

    fwd = jax.jit(learnable_gaussian_smoothing)

    # Case 1: module-default small shapes (B=2, L=16, C=3).
    x1 = jax.random.normal(key, (2, 16, CHANNELS), dtype=jnp.float32)
    y1 = jax.block_until_ready(fwd(x1, module_kernel))
    assert y1.shape == (2, 16, CHANNELS), y1.shape
    assert jnp.allclose(y1, _reference(x1, module_kernel), atol=1e-5, rtol=1e-5)

    # Case 2: 2-D input path (unsqueeze, as in the module).
    x2 = jax.random.normal(jax.random.fold_in(key, 1), (16, CHANNELS), jnp.float32)
    y2 = jax.block_until_ready(fwd(x2, module_kernel))
    assert y2.shape == (1, 16, CHANNELS), y2.shape
    assert jnp.allclose(y2, _reference(x2, module_kernel), atol=1e-5, rtol=1e-5)

    # Case 3: multi-lane-tile + partial last tile + partial row block + diverged
    # per-channel taps (forced via a small max_lane_tile to exercise the halo path).
    x3 = jax.random.normal(jax.random.fold_in(key, 2), (5, 700, CHANNELS), jnp.float32)
    w3 = module_kernel * jnp.array([0.7, 1.0, 1.3], jnp.float32)[:, None, None]
    fwd_small = jax.jit(lambda a, b: learnable_gaussian_smoothing(a, b, max_lane_tile=768))
    y3 = jax.block_until_ready(fwd_small(x3, w3))
    assert y3.shape == (5, 700, CHANNELS), y3.shape
    assert jnp.allclose(y3, _reference(x3, w3), atol=1e-5, rtol=1e-5)

    print("KERNEL_OK")
</pallas_src>

<mosaic_0001>
module attributes {stable_mosaic.version = 11 : i64} {
  func.func @kernel(%arg0: i32, %arg1: i32, %arg2: memref<8x128xf32, #tpu.memory_space<vmem>>, %arg3: memref<8x256xf32, #tpu.memory_space<vmem>>, %arg4: memref<5x128xf32, #tpu.memory_space<vmem>>, %arg5: memref<8x128xf32, #tpu.memory_space<vmem>>, %arg6: memref<8x384xf32, #tpu.memory_space<vmem>>) attributes {dimension_semantics = [#tpu.dimension_semantics<parallel>, #tpu.dimension_semantics<parallel>], iteration_bounds = array<i64: 1, 1>, scalar_prefetch = 0 : i64, scratch_operands = 1 : i64, tpu.core_type = #tpu.core_type<tc>, window_params = [{transform_indices = @transform_0, window_bounds = array<i64: 8, 128>}, {transform_indices = @transform_1, window_bounds = array<i64: 8, 256>}, {pipeline_mode = #tpu.pipeline_mode<synchronous>, transform_indices = @transform_2, window_bounds = array<i64: 5, 128>}, {transform_indices = @transform_3, window_bounds = array<i64: 8, 128>}]} {
    %c0 = arith.constant 0 : index
    %c0_0 = arith.constant 0 : index
    %0 = vector.load %arg3[%c0, %c0_0] : memref<8x256xf32, #tpu.memory_space<vmem>>, vector<8x128xf32>
    %c0_1 = arith.constant 0 : index
    %c0_2 = arith.constant 0 : index
    %1 = vector.load %arg6[%c0_1, %c0_2] : memref<8x384xf32, #tpu.memory_space<vmem>>, vector<8x128xf32>
    tpu.vector_store %arg6[%c0_1, %c0_2], %0 {strides = array<i32>} : memref<8x384xf32, #tpu.memory_space<vmem>>, vector<8x128xf32>,
    %c0_3 = arith.constant 0 : index
    %c0_4 = arith.constant 0 : index
    %2 = vector.load %arg2[%c0_3, %c0_4] : memref<8x128xf32, #tpu.memory_space<vmem>>, vector<8x128xf32>
    %c0_5 = arith.constant 0 : index
    %c128 = arith.constant 128 : index
    %3 = vector.load %arg6[%c0_5, %c128] : memref<8x384xf32, #tpu.memory_space<vmem>>, vector<8x128xf32>
    tpu.vector_store %arg6[%c0_5, %c128], %2 {strides = array<i32>} : memref<8x384xf32, #tpu.memory_space<vmem>>, vector<8x128xf32>,
    %c0_6 = arith.constant 0 : index
    %c128_7 = arith.constant 128 : index
    %4 = vector.load %arg3[%c0_6, %c128_7] : memref<8x256xf32, #tpu.memory_space<vmem>>, vector<8x128xf32>
    %c0_8 = arith.constant 0 : index
    %c256 = arith.constant 256 : index
    %5 = vector.load %arg6[%c0_8, %c256] : memref<8x384xf32, #tpu.memory_space<vmem>>, vector<8x128xf32>
    tpu.vector_store %arg6[%c0_8, %c256], %4 {strides = array<i32>} : memref<8x384xf32, #tpu.memory_space<vmem>>, vector<8x128xf32>,
    %c0_i32 = arith.constant 0 : i32
    %6 = arith.cmpi eq, %arg1, %c0_i32 : i32
    %7 = arith.extui %6 : i1 to i32
    %c0_i32_9 = arith.constant 0 : i32
    %8 = arith.cmpi ne, %7, %c0_i32_9 : i32
    scf.if %8 {
      %cst = arith.constant 0.000000e+00 : f32
      %34 = vector.broadcast %cst : f32 to vector<8x6xf32>
      %c0_24 = arith.constant 0 : index
      %c176 = arith.constant 176 : index
      %35 = vector.load %arg6[%c0_24, %c176] : memref<8x384xf32, #tpu.memory_space<vmem>>, vector<8x6xf32>
      tpu.vector_store %arg6[%c0_24, %c176], %34 {strides = array<i32>} : memref<8x384xf32, #tpu.memory_space<vmem>>, vector<8x6xf32>,
    } else {
    }
    %c0_10 = arith.constant 0 : index
    %c0_11 = arith.constant 0 : index
    %9 = vector.load %arg4[%c0_10, %c0_11] : memref<5x128xf32, #tpu.memory_space<vmem>>, vector<1x128xf32>
    %c0_12 = arith.constant 0 : index
    %c122 = arith.constant 122 : index
    %10 = vector.load %arg6[%c0_12, %c122] : memref<8x384xf32, #tpu.memory_space<vmem>>, vector<8x128xf32>
    %11 = vector.broadcast %9 : vector<1x128xf32> to vector<8x128xf32>
    %12 = arith.mulf %11, %10 : vector<8x128xf32>
    %c1 = arith.constant 1 : index
    %c0_13 = arith.constant 0 : index
    %13 = vector.load %arg4[%c1, %c0_13] : memref<5x128xf32, #tpu.memory_space<vmem>>, vector<1x128xf32>
    %c0_14 = arith.constant 0 : index
    %c125 = arith.constant 125 : index
    %14 = vector.load %arg6[%c0_14, %c125] : memref<8x384xf32, #tpu.memory_space<vmem>>, vector<8x128xf32>
    %15 = vector.broadcast %13 : vector<1x128xf32> to vector<8x128xf32>
    %16 = arith.mulf %15, %14 : vector<8x128xf32>
    %17 = arith.addf %12, %16 : vector<8x128xf32>
    %c2 = arith.constant 2 : index
    %c0_15 = arith.constant 0 : index
    %18 = vector.load %arg4[%c2, %c0_15] : memref<5x128xf32, #tpu.memory_space<vmem>>, vector<1x128xf32>
    %c0_16 = arith.constant 0 : index
    %c128_17 = arith.constant 128 : index
    %19 = vector.load %arg6[%c0_16, %c128_17] : memref<8x384xf32, #tpu.memory_space<vmem>>, vector<8x128xf32>
    %20 = vector.broadcast %18 : vector<1x128xf32> to vector<8x128xf32>
    %21 = arith.mulf %20, %19 : vector<8x128xf32>
    %22 = arith.addf %17, %21 : vector<8x128xf32>
    %c3 = arith.constant 3 : index
    %c0_18 = arith.constant 0 : index
    %23 = vector.load %arg4[%c3, %c0_18] : memref<5x128xf32, #tpu.memory_space<vmem>>, vector<1x128xf32>
    %c0_19 = arith.constant 0 : index
    %c131 = arith.constant 131 : index
    %24 = vector.load %arg6[%c0_19, %c131] : memref<8x384xf32, #tpu.memory_space<vmem>>, vector<8x128xf32>
    %25 = vector.broadcast %23 : vector<1x128xf32> to vector<8x128xf32>
    %26 = arith.mulf %25, %24 : vector<8x128xf32>
    %27 = arith.addf %22, %26 : vector<8x128xf32>
    %c4 = arith.constant 4 : index
    %c0_20 = arith.constant 0 : index
    %28 = vector.load %arg4[%c4, %c0_20] : memref<5x128xf32, #tpu.memory_space<vmem>>, vector<1x128xf32>
    %c0_21 = arith.constant 0 : index
    %c134 = arith.constant 134 : index
    %29 = vector.load %arg6[%c0_21, %c134] : memref<8x384xf32, #tpu.memory_space<vmem>>, vector<8x128xf32>
    %30 = vector.broadcast %28 : vector<1x128xf32> to vector<8x128xf32>
    %31 = arith.mulf %30, %29 : vector<8x128xf32>
    %32 = arith.addf %27, %31 : vector<8x128xf32>
    %c0_22 = arith.constant 0 : index
    %c0_23 = arith.constant 0 : index
    %33 = vector.load %arg5[%c0_22, %c0_23] : memref<8x128xf32, #tpu.memory_space<vmem>>, vector<8x128xf32>
    tpu.vector_store %arg5[%c0_22, %c0_23], %32 {strides = array<i32>} : memref<8x128xf32, #tpu.memory_space<vmem>>, vector<8x128xf32>,
    return
  }
  func.func @transform_0(%arg0: i32, %arg1: i32) -> (i32, i32) {
    %c0_i32 = arith.constant 0 : i32
    return %arg0, %arg1 : i32, i32
  }
  func.func @transform_1(%arg0: i32, %arg1: i32) -> (i32, i32) {
    %c0_i32 = arith.constant 0 : i32
    return %arg0, %arg1 : i32, i32
  }
  func.func @transform_2(%arg0: i32, %arg1: i32) -> (i32, i32) {
    %c0_i32 = arith.constant 0 : i32
    %c0_i32_0 = arith.constant 0 : i32
    %c0_i32_1 = arith.constant 0 : i32
    return %c0_i32, %c0_i32_0 : i32, i32
  }
  func.func @transform_3(%arg0: i32, %arg1: i32) -> (i32, i32) {
    %c0_i32 = arith.constant 0 : i32
    return %arg0, %arg1 : i32, i32
  }
}

</mosaic_0001>

<llo_original>
// kernel: tile.9
$region0: #{tile.9}
  %s0 = inlined_call_operand.vmem [shape: f32[5,43,3], index: 0, kind: input, shape index: {}]
  %s1 = inlined_call_operand.vmem [shape: f32[5,129], index: 1, kind: output, shape index: {}]
  %s2 = smov 3
  %v3 = vld [vmem:[%s0] ss:$48 sm:%s2]
  %s4 = smov 12
  %v5 = vld [vmem:[%s0] ss:$48 sm:%s4]
  %vm6 = vcmask 1043458
  %v7 = vsel %vm6, %v5, %v3
  %s8 = scalar_lea.vmem %s0, 188
  %v9 = vld [vmem:[%s8] sm:$0x10]
  %vm10 = vcmask 1044484
  %v11 = vsel %vm10, %v9, %v7
  %vm12 = vcmask 23552
  %13 = vst.msk [vmem:[%s1] sm:$0x1f] %vm12, %v11
  %s14 = scalar_lea.vmem %s0, 42
  %s15 = smov 3
  %v16 = vld [vmem:[%s14] ss:$48 sm:%s15]
  %s17 = scalar_lea.vmem %s0, 42
  %s18 = smov 12
  %v19 = vld [vmem:[%s17] ss:$48 sm:%s18]
  %vm20 = vcmask 1043458
  %v21 = vsel %vm20, %v19, %v16
  %s22 = scalar_lea.vmem %s0, 230
  %v23 = vld [vmem:[%s22] sm:$0x10]
  %vm24 = vcmask 1044484
  %v25 = vsel %vm24, %v23, %v21
  %s26 = scalar_lea.vmem %s0, 42
  %s27 = smov 3
  %v28 = vld [vmem:[%s26] ss:$48 sm:%s27]
  %s29 = scalar_lea.vmem %s0, 42
  %s30 = smov 12
  %v31 = vld [vmem:[%s29] ss:$48 sm:%s30]
  %vm32 = vcmask 1043458
  %v33 = vsel %vm32, %v31, %v28
  %s34 = scalar_lea.vmem %s0, 230
  %v35 = vld [vmem:[%s34] sm:$0x10]
  %vm36 = vcmask 1044484
  %v37 = vsel %vm36, %v35, %v33
  %vm38 = vcmask 15360
  %v39 = vsel %vm38, %v37, %v25
  %40 = vrot.lane.b32.xlu0 %v39, 126
  %v41 = vpop.permute.xlu0 %40
  %vm42 = vcmask 7168
  %s43 = scalar_lea.vmem %s1, 8
  %44 = vst.msk [vmem:[%s43] sm:$0x1f] %vm42, %v41
  %vm45 = vcmask 1048560
  %46 = vst.msk [vmem:[%s1] sm:$0x1f] %vm45, %v41
  %s47 = scalar_lea.vmem %s0, 41
  %s48 = smov 3
  %v49 = vld [vmem:[%s47] ss:$48 sm:%s48]
  %s50 = scalar_lea.vmem %s0, 41
  %s51 = smov 12
  %v52 = vld [vmem:[%s50] ss:$48 sm:%s51]
  %vm53 = vcmask 1043458
  %v54 = vsel %vm53, %v52, %v49
  %s55 = scalar_lea.vmem %s0, 229
  %v56 = vld [vmem:[%s55] sm:$0x10]
  %vm57 = vcmask 1044484
  %v58 = vsel %vm57, %v56, %v54
  %59 = vrot.lane.b32.xlu0 %v58, 123
  %v60 = vpop.permute.xlu0 %59
  %vm61 = vcmask 1032152
  %62 = vst.msk [vmem:[%s1] sm:$0x1f] %vm61, %v60
  %s63 = scalar_lea.vmem %s0, 40
  %s64 = smov 3
  %v65 = vld [vmem:[%s63] ss:$48 sm:%s64]
  %s66 = scalar_lea.vmem %s0, 40
  %s67 = smov 12
  %v68 = vld [vmem:[%s66] ss:$48 sm:%s67]
  %vm69 = vcmask 1043458
  %v70 = vsel %vm69, %v68, %v65
  %s71 = scalar_lea.vmem %s0, 228
  %v72 = vld [vmem:[%s71] sm:$0x10]
  %vm73 = vcmask 1044484
  %v74 = vsel %vm73, %v72, %v70
  %75 = vrot.lane.b32.xlu0 %v74, 120
  %v76 = vpop.permute.xlu0 %75
  %vm77 = vcmask 1007552
  %78 = vst.msk [vmem:[%s1] sm:$0x1f] %vm77, %v76
  %s79 = scalar_lea.vmem %s0, 39
  %s80 = smov 3
  %v81 = vld [vmem:[%s79] ss:$48 sm:%s80]
  %s82 = scalar_lea.vmem %s0, 39
  %s83 = smov 12
  %v84 = vld [vmem:[%s82] ss:$48 sm:%s83]
  %vm85 = vcmask 1043458
  %v86 = vsel %vm85, %v84, %v81
  %s87 = scalar_lea.vmem %s0, 227
  %v88 = vld [vmem:[%s87] sm:$0x10]
  %vm89 = vcmask 1044484
  %v90 = vsel %vm89, %v88, %v86
  %91 = vrot.lane.b32.xlu0 %v90, 117
  %v92 = vpop.permute.xlu0 %91
  %vm93 = vcmask 982952
  %94 = vst.msk [vmem:[%s1] sm:$0x1f] %vm93, %v92
  %s95 = scalar_lea.vmem %s0, 38
  %s96 = smov 3
  %v97 = vld [vmem:[%s95] ss:$48 sm:%s96]
  %s98 = scalar_lea.vmem %s0, 38
  %s99 = smov 12
  %v100 = vld [vmem:[%s98] ss:$48 sm:%s99]
  %vm101 = vcmask 1043458
  %v102 = vsel %vm101, %v100, %v97
  %s103 = scalar_lea.vmem %s0, 226
  %v104 = vld [vmem:[%s103] sm:$0x10]
  %vm105 = vcmask 1044484
  %v106 = vsel %vm105, %v104, %v102
  %107 = vrot.lane.b32.xlu0 %v106, 114
  %v108 = vpop.permute.xlu0 %107
  %vm109 = vcmask 958352
  %110 = vst.msk [vmem:[%s1] sm:$0x1f] %vm109, %v108
  %s111 = scalar_lea.vmem %s0, 37
  %s112 = smov 3
  %v113 = vld [vmem:[%s111] ss:$48 sm:%s112]
  %s114 = scalar_lea.vmem %s0, 37
  %s115 = smov 12
  %v116 = vld [vmem:[%s114] ss:$48 sm:%s115]
  %vm117 = vcmask 1043458
  %v118 = vsel %vm117, %v116, %v113
  %s119 = scalar_lea.vmem %s0, 225
  %v120 = vld [vmem:[%s119] sm:$0x10]
  %vm121 = vcmask 1044484
  %v122 = vsel %vm121, %v120, %v118
  %123 = vrot.lane.b32.xlu0 %v122, 111
  %v124 = vpop.permute.xlu0 %123
  %vm125 = vcmask 933752
  %126 = vst.msk [vmem:[%s1] sm:$0x1f] %vm125, %v124
  %s127 = scalar_lea.vmem %s0, 36
  %s128 = smov 3
  %v129 = vld [vmem:[%s127] ss:$48 sm:%s128]
  %s130 = scalar_lea.vmem %s0, 36
  %s131 = smov 12
  %v132 = vld [vmem:[%s130] ss:$48 sm:%s131]
  %vm133 = vcmask 1043458
  %v134 = vsel %vm133, %v132, %v129
  %s135 = scalar_lea.vmem %s0, 224
  %v136 = vld [vmem:[%s135] sm:$0x10]
  %vm137 = vcmask 1044484
  %v138 = vsel %vm137, %v136, %v134
  %139 = vrot.lane.b32.xlu0 %v138, 108
  %v140 = vpop.permute.xlu0 %139
  %vm141 = vcmask 909152
  %142 = vst.msk [vmem:[%s1] sm:$0x1f] %vm141, %v140
  %s143 = scalar_lea.vmem %s0, 35
  %s144 = smov 3
  %v145 = vld [vmem:[%s143] ss:$48 sm:%s144]
  %s146 = scalar_lea.vmem %s0, 35
  %s147 = smov 12
  %v148 = vld [vmem:[%s146] ss:$48 sm:%s147]
  %vm149 = vcmask 1043458
  %v150 = vsel %vm149, %v148, %v145
  %s151 = scalar_lea.vmem %s0, 223
  %v152 = vld [vmem:[%s151] sm:$0x10]
  %vm153 = vcmask 1044484
  %v154 = vsel %vm153, %v152, %v150
  %155 = vrot.lane.b32.xlu0 %v154, 105
  %v156 = vpop.permute.xlu0 %155
  %vm157 = vcmask 884552
  %158 = vst.msk [vmem:[%s1] sm:$0x1f] %vm157, %v156
  %s159 = scalar_lea.vmem %s0, 34
  %s160 = smov 3
  %v161 = vld [vmem:[%s159] ss:$48 sm:%s160]
  %s162 = scalar_lea.vmem %s0, 34
  %s163 = smov 12
  %v164 = vld [vmem:[%s162] ss:$48 sm:%s163]
  %vm165 = vcmask 1043458
  %v166 = vsel %vm165, %v164, %v161
  %s167 = scalar_lea.vmem %s0, 222
  %v168 = vld [vmem:[%s167] sm:$0x10]
  %vm169 = vcmask 1044484
  %v170 = vsel %vm169, %v168, %v166
  %171 = vrot.lane.b32.xlu0 %v170, 102
  %v172 = vpop.permute.xlu0 %171
  %vm173 = vcmask 859952
  %174 = vst.msk [vmem:[%s1] sm:$0x1f] %vm173, %v172
  %s175 = scalar_lea.vmem %s0, 33
  %s176 = smov 3
  %v177 = vld [vmem:[%s175] ss:$48 sm:%s176]
  %s178 = scalar_lea.vmem %s0, 33
  %s179 = smov 12
  %v180 = vld [vmem:[%s178] ss:$48 sm:%s179]
  %vm181 = vcmask 1043458
  %v182 = vsel %vm181, %v180, %v177
  %s183 = scalar_lea.vmem %s0, 221
  %v184 = vld [vmem:[%s183] sm:$0x10]
  %vm185 = vcmask 1044484
  %v186 = vsel %vm185, %v184, %v182
  %187 = vrot.lane.b32.xlu0 %v186, 99
  %v188 = vpop.permute.xlu0 %187
  %vm189 = vcmask 835352
  %190 = vst.msk [vmem:[%s1] sm:$0x1f] %vm189, %v188
  %s191 = scalar_lea.vmem %s0, 32
  %s192 = smov 3
  %v193 = vld [vmem:[%s191] ss:$48 sm:%s192]
  %s194 = scalar_lea.vmem %s0, 32
  %s195 = smov 12
  %v196 = vld [vmem:[%s194] ss:$48 sm:%s195]
  %vm197 = vcmask 1043458
  %v198 = vsel %vm197, %v196, %v193
  %s199 = scalar_lea.vmem %s0, 220
  %v200 = vld [vmem:[%s199] sm:$0x10]
  %vm201 = vcmask 1044484
  %v202 = vsel %vm201, %v200, %v198
  %203 = vrot.lane.b32.xlu0 %v202, 96
  %v204 = vpop.permute.xlu0 %203
  %vm205 = vcmask 810752
  %206 = vst.msk [vmem:[%s1] sm:$0x1f] %vm205, %v204
  %s207 = scalar_lea.vmem %s0, 31
  %s208 = smov 3
  %v209 = vld [vmem:[%s207] ss:$48 sm:%s208]
  %s210 = scalar_lea.vmem %s0, 31
  %s211 = smov 12
  %v212 = vld [vmem:[%s210] ss:$48 sm:%s211]
  %vm213 = vcmask 1043458
  %v214 = vsel %vm213, %v212, %v209
  %s215 = scalar_lea.vmem %s0, 219
  %v216 = vld [vmem:[%s215] sm:$0x10]
  %vm217 = vcmask 1044484
  %v218 = vsel %vm217, %v216, %v214
  %219 = vrot.lane.b32.xlu0 %v218, 93
  %v220 = vpop.permute.xlu0 %219
  %vm221 = vcmask 786152
  %222 = vst.msk [vmem:[%s1] sm:$0x1f] %vm221, %v220
  %s223 = scalar_lea.vmem %s0, 30
  %s224 = smov 3
  %v225 = vld [vmem:[%s223] ss:$48 sm:%s224]
  %s226 = scalar_lea.vmem %s0, 30
  %s227 = smov 12
  %v228 = vld [vmem:[%s226] ss:$48 sm:%s227]
  %vm229 = vcmask 1043458
  %v230 = vsel %vm229, %v228, %v225
  %s231 = scalar_lea.vmem %s0, 218
  %v232 = vld [vmem:[%s231] sm:$0x10]
  %vm233 = vcmask 1044484
  %v234 = vsel %vm233, %v232, %v230
  %235 = vrot.lane.b32.xlu0 %v234, 90
  %v236 = vpop.permute.xlu0 %235
  %vm237 = vcmask 761552
  %238 = vst.msk [vmem:[%s1] sm:$0x1f] %vm237, %v236
  %s239 = scalar_lea.vmem %s0, 29
  %s240 = smov 3
  %v241 = vld [vmem:[%s239] ss:$48 sm:%s240]
  %s242 = scalar_lea.vmem %s0, 29
  %s243 = smov 12
  %v244 = vld [vmem:[%s242] ss:$48 sm:%s243]
  %vm245 = vcmask 1043458
  %v246 = vsel %vm245, %v244, %v241
  %s247 = scalar_lea.vmem %s0, 217
  %v248 = vld [vmem:[%s247] sm:$0x10]
  %vm249 = vcmask 1044484
  %v250 = vsel %vm249, %v248, %v246
  %251 = vrot.lane.b32.xlu0 %v250, 87
  %v252 = vpop.permute.xlu0 %251
  %vm253 = vcmask 736952
  %254 = vst.msk [vmem:[%s1] sm:$0x1f] %vm253, %v252
  %s255 = scalar_lea.vmem %s0, 28
  %s256 = smov 3
  %v257 = vld [vmem:[%s255] ss:$48 sm:%s256]
  %s258 = scalar_lea.vmem %s0, 28
  %s259 = smov 12
  %v260 = vld [vmem:[%s258] ss:$48 sm:%s259]
  %vm261 = vcmask 1043458
  %v262 = vsel %vm261, %v260, %v257
  %s263 = scalar_lea.vmem %s0, 216
  %v264 = vld [vmem:[%s263] sm:$0x10]
  %vm265 = vcmask 1044484
  %v266 = vsel %vm265, %v264, %v262
  %267 = vrot.lane.b32.xlu0 %v266, 84
  %v268 = vpop.permute.xlu0 %267
  %vm269 = vcmask 712352
  %270 = vst.msk [vmem:[%s1] sm:$0x1f] %vm269, %v268
  %s271 = scalar_lea.vmem %s0, 27
  %s272 = smov 3
  %v273 = vld [vmem:[%s271] ss:$48 sm:%s272]
  %s274 = scalar_lea.vmem %s0, 27
  %s275 = smov 12
  %v276 = vld [vmem:[%s274] ss:$48 sm:%s275]
  %vm277 = vcmask 1043458
  %v278 = vsel %vm277, %v276, %v273
  %s279 = scalar_lea.vmem %s0, 215
  %v280 = vld [vmem:[%s279] sm:$0x10]
  %vm281 = vcmask 1044484
  %v282 = vsel %vm281, %v280, %v278
  %283 = vrot.lane.b32.xlu0 %v282, 81
  %v284 = vpop.permute.xlu0 %283
  %vm285 = vcmask 687752
  %286 = vst.msk [vmem:[%s1] sm:$0x1f] %vm285, %v284
  %s287 = scalar_lea.vmem %s0, 26
  %s288 = smov 3
  %v289 = vld [vmem:[%s287] ss:$48 sm:%s288]
  %s290 = scalar_lea.vmem %s0, 26
  %s291 = smov 12
  %v292 = vld [vmem:[%s290] ss:$48 sm:%s291]
  %vm293 = vcmask 1043458
  %v294 = vsel %vm293, %v292, %v289
  %s295 = scalar_lea.vmem %s0, 214
  %v296 = vld [vmem:[%s295] sm:$0x10]
  %vm297 = vcmask 1044484
  %v298 = vsel %vm297, %v296, %v294
  %299 = vrot.lane.b32.xlu0 %v298, 78
  %v300 = vpop.permute.xlu0 %299
  %vm301 = vcmask 663152
  %302 = vst.msk [vmem:[%s1] sm:$0x1f] %vm301, %v300
  %s303 = scalar_lea.vmem %s0, 25
  %s304 = smov 3
  %v305 = vld [vmem:[%s303] ss:$48 sm:%s304]
  %s306 = scalar_lea.vmem %s0, 25
  %s307 = smov 12
  %v308 = vld [vmem:[%s306] ss:$48 sm:%s307]
  %vm309 = vcmask 1043458
  %v310 = vsel %vm309, %v308, %v305
  %s311 = scalar_lea.vmem %s0, 213
  %v312 = vld [vmem:[%s311] sm:$0x10]
  %vm313 = vcmask 1044484
  %v314 = vsel %vm313, %v312, %v310
  %315 = vrot.lane.b32.xlu0 %v314, 75
  %v316 = vpop.permute.xlu0 %315
  %vm317 = vcmask 638552
  %318 = vst.msk [vmem:[%s1] sm:$0x1f] %vm317, %v316
  %s319 = scalar_lea.vmem %s0, 24
  %s320 = smov 3
  %v321 = vld [vmem:[%s319] ss:$48 sm:%s320]
  %s322 = scalar_lea.vmem %s0, 24
  %s323 = smov 12
  %v324 = vld [vmem:[%s322] ss:$48 sm:%s323]
  %vm325 = vcmask 1043458
  %v326 = vsel %vm325, %v324, %v321
  %s327 = scalar_lea.vmem %s0, 212
  %v328 = vld [vmem:[%s327] sm:$0x10]
  %vm329 = vcmask 1044484
  %v330 = vsel %vm329, %v328, %v326
  %331 = vrot.lane.b32.xlu0 %v330, 72
  %v332 = vpop.permute.xlu0 %331
  %vm333 = vcmask 613952
  %334 = vst.msk [vmem:[%s1] sm:$0x1f] %vm333, %v332
  %s335 = scalar_lea.vmem %s0, 23
  %s336 = smov 3
  %v337 = vld [vmem:[%s335] ss:$48 sm:%s336]
  %s338 = scalar_lea.vmem %s0, 23
  %s339 = smov 12
  %v340 = vld [vmem:[%s338] ss:$48 sm:%s339]
  %vm341 = vcmask 1043458
  %v342 = vsel %vm341, %v340, %v337
  %s343 = scalar_lea.vmem %s0, 211
  %v344 = vld [vmem:[%s343] sm:$0x10]
  %vm345 = vcmask 1044484
  %v346 = vsel %vm345, %v344, %v342
  %347 = vrot.lane.b32.xlu0 %v346, 69
  %v348 = vpop.permute.xlu0 %347
  %vm349 = vcmask 589352
  %350 = vst.msk [vmem:[%s1] sm:$0x1f] %vm349, %v348
  %s351 = scalar_lea.vmem %s0, 22
  %s352 = smov 3
  %v353 = vld [vmem:[%s351] ss:$48 sm:%s352]
  %s354 = scalar_lea.vmem %s0, 22
  %s355 = smov 12
  %v356 = vld [vmem:[%s354] ss:$48 sm:%s355]
  %vm357 = vcmask 1043458
  %v358 = vsel %vm357, %v356, %v353
  %s359 = scalar_lea.vmem %s0, 210
  %v360 = vld [vmem:[%s359] sm:$0x10]
  %vm361 = vcmask 1044484
  %v362 = vsel %vm361, %v360, %v358
  %363 = vrot.lane.b32.xlu0 %v362, 66
  %v364 = vpop.permute.xlu0 %363
  %vm365 = vcmask 564752
  %366 = vst.msk [vmem:[%s1] sm:$0x1f] %vm365, %v364
  %s367 = scalar_lea.vmem %s0, 21
  %s368 = smov 3
  %v369 = vld [vmem:[%s367] ss:$48 sm:%s368]
  %s370 = scalar_lea.vmem %s0, 21
  %s371 = smov 12
  %v372 = vld [vmem:[%s370] ss:$48 sm:%s371]
  %vm373 = vcmask 1043458
  %v374 = vsel %vm373, %v372, %v369
  %s375 = scalar_lea.vmem %s0, 209
  %v376 = vld [vmem:[%s375] sm:$0x10]
  %vm377 = vcmask 1044484
  %v378 = vsel %vm377, %v376, %v374
  %379 = vrot.lane.b32.xlu0 %v378, 63
  %v380 = vpop.permute.xlu0 %379
  %vm381 = vcmask 540152
  %382 = vst.msk [vmem:[%s1] sm:$0x1f] %vm381, %v380
  %s383 = scalar_lea.vmem %s0, 20
  %s384 = smov 3
  %v385 = vld [vmem:[%s383] ss:$48 sm:%s384]
  %s386 = scalar_lea.vmem %s0, 20
  %s387 = smov 12
  %v388 = vld [vmem:[%s386] ss:$48 sm:%s387]
  %vm389 = vcmask 1043458
  %v390 = vsel %vm389, %v388, %v385
  %s391 = scalar_lea.vmem %s0, 208
  %v392 = vld [vmem:[%s391] sm:$0x10]
  %vm393 = vcmask 1044484
  %v394 = vsel %vm393, %v392, %v390
  %395 = vrot.lane.b32.xlu0 %v394, 60
  %v396 = vpop.permute.xlu0 %395
  %vm397 = vcmask 515552
  %398 = vst.msk [vmem:[%s1] sm:$0x1f] %vm397, %v396
  %s399 = scalar_lea.vmem %s0, 19
  %s400 = smov 3
  %v401 = vld [vmem:[%s399] ss:$48 sm:%s400]
  %s402 = scalar_lea.vmem %s0, 19
  %s403 = smov 12
  %v404 = vld [vmem:[%s402] ss:$48 sm:%s403]
  %vm405 = vcmask 1043458
  %v406 = vsel %vm405, %v404, %v401
  %s407 = scalar_lea.vmem %s0, 207
  %v408 = vld [vmem:[%s407] sm:$0x10]
  %vm409 = vcmask 1044484
  %v410 = vsel %vm409, %v408, %v406
  %411 = vrot.lane.b32.xlu0 %v410, 57
  %v412 = vpop.permute.xlu0 %411
  %vm413 = vcmask 490952
  %414 = vst.msk [vmem:[%s1] sm:$0x1f] %vm413, %v412
  %s415 = scalar_lea.vmem %s0, 18
  %s416 = smov 3
  %v417 = vld [vmem:[%s415] ss:$48 sm:%s416]
  %s418 = scalar_lea.vmem %s0, 18
  %s419 = smov 12
  %v420 = vld [vmem:[%s418] ss:$48 sm:%s419]
  %vm421 = vcmask 1043458
  %v422 = vsel %vm421, %v420, %v417
  %s423 = scalar_lea.vmem %s0, 206
  %v424 = vld [vmem:[%s423] sm:$0x10]
  %vm425 = vcmask 1044484
  %v426 = vsel %vm425, %v424, %v422
  %427 = vrot.lane.b32.xlu0 %v426, 54
  %v428 = vpop.permute.xlu0 %427
  %vm429 = vcmask 466352
  %430 = vst.msk [vmem:[%s1] sm:$0x1f] %vm429, %v428
  %s431 = scalar_lea.vmem %s0, 17
  %s432 = smov 3
  %v433 = vld [vmem:[%s431] ss:$48 sm:%s432]
  %s434 = scalar_lea.vmem %s0, 17
  %s435 = smov 12
  %v436 = vld [vmem:[%s434] ss:$48 sm:%s435]
  %vm437 = vcmask 1043458
  %v438 = vsel %vm437, %v436, %v433
  %s439 = scalar_lea.vmem %s0, 205
  %v440 = vld [vmem:[%s439] sm:$0x10]
  %vm441 = vcmask 1044484
  %v442 = vsel %vm441, %v440, %v438
  %443 = vrot.lane.b32.xlu0 %v442, 51
  %v444 = vpop.permute.xlu0 %443
  %vm445 = vcmask 441752
  %446 = vst.msk [vmem:[%s1] sm:$0x1f] %vm445, %v444
  %s447 = scalar_lea.vmem %s0, 16
  %s448 = smov 3
  %v449 = vld [vmem:[%s447] ss:$48 sm:%s448]
  %s450 = scalar_lea.vmem %s0, 16
  %s451 = smov 12
  %v452 = vld [vmem:[%s450] ss:$48 sm:%s451]
  %vm453 = vcmask 1043458
  %v454 = vsel %vm453, %v452, %v449
  %s455 = scalar_lea.vmem %s0, 204
  %v456 = vld [vmem:[%s455] sm:$0x10]
  %vm457 = vcmask 1044484
  %v458 = vsel %vm457, %v456, %v454
  %459 = vrot.lane.b32.xlu0 %v458, 48
  %v460 = vpop.permute.xlu0 %459
  %vm461 = vcmask 417152
  %462 = vst.msk [vmem:[%s1] sm:$0x1f] %vm461, %v460
  %s463 = scalar_lea.vmem %s0, 15
  %s464 = smov 3
  %v465 = vld [vmem:[%s463] ss:$48 sm:%s464]
  %s466 = scalar_lea.vmem %s0, 15
  %s467 = smov 12
  %v468 = vld [vmem:[%s466] ss:$48 sm:%s467]
  %vm469 = vcmask 1043458
  %v470 = vsel %vm469, %v468, %v465
  %s471 = scalar_lea.vmem %s0, 203
  %v472 = vld [vmem:[%s471] sm:$0x10]
  %vm473 = vcmask 1044484
  %v474 = vsel %vm473, %v472, %v470
  %475 = vrot.lane.b32.xlu0 %v474, 45
  %v476 = vpop.permute.xlu0 %475
  %vm477 = vcmask 392552
  %478 = vst.msk [vmem:[%s1] sm:$0x1f] %vm477, %v476
  %s479 = scalar_lea.vmem %s0, 14
  %s480 = smov 3
  %v481 = vld [vmem:[%s479] ss:$48 sm:%s480]
  %s482 = scalar_lea.vmem %s0, 14
  %s483 = smov 12
  %v484 = vld [vmem:[%s482] ss:$48 sm:%s483]
  %vm485 = vcmask 1043458
  %v486 = vsel %vm485, %v484, %v481
  %s487 = scalar_lea.vmem %s0, 202
  %v488 = vld [vmem:[%s487] sm:$0x10]
  %vm489 = vcmask 1044484
  %v490 = vsel %vm489, %v488, %v486
  %491 = vrot.lane.b32.xlu0 %v490, 42
  %v492 = vpop.permute.xlu0 %491
  %vm493 = vcmask 367952
  %494 = vst.msk [vmem:[%s1] sm:$0x1f] %vm493, %v492
  %s495 = scalar_lea.vmem %s0, 13
  %s496 = smov 3
  %v497 = vld [vmem:[%s495] ss:$48 sm:%s496]
  %s498 = scalar_lea.vmem %s0, 13
  %s499 = smov 12
  %v500 = vld [vmem:[%s498] ss:$48 sm:%s499]
  %vm501 = vcmask 1043458
  %v502 = vsel %vm501, %v500, %v497
  %s503 = scalar_lea.vmem %s0, 201
  %v504 = vld [vmem:[%s503] sm:$0x10]
  %vm505 = vcmask 1044484
  %v506 = vsel %vm505, %v504, %v502
  %507 = vrot.lane.b32.xlu0 %v506, 39
  %v508 = vpop.permute.xlu0 %507
  %vm509 = vcmask 343352
  %510 = vst.msk [vmem:[%s1] sm:$0x1f] %vm509, %v508
  %s511 = scalar_lea.vmem %s0, 12
  %s512 = smov 3
  %v513 = vld [vmem:[%s511] ss:$48 sm:%s512]
  %s514 = scalar_lea.vmem %s0, 12
  %s515 = smov 12
  %v516 = vld [vmem:[%s514] ss:$48 sm:%s515]
  %vm517 = vcmask 1043458
  %v518 = vsel %vm517, %v516, %v513
  %s519 = scalar_lea.vmem %s0, 200
  %v520 = vld [vmem:[%s519] sm:$0x10]
  %vm521 = vcmask 1044484
  %v522 = vsel %vm521, %v520, %v518
  %523 = vrot.lane.b32.xlu0 %v522, 36
  %v524 = vpop.permute.xlu0 %523
  %vm525 = vcmask 318752
  %526 = vst.msk [vmem:[%s1] sm:$0x1f] %vm525, %v524
  %s527 = scalar_lea.vmem %s0, 11
  %s528 = smov 3
  %v529 = vld [vmem:[%s527] ss:$48 sm:%s528]
  %s530 = scalar_lea.vmem %s0, 11
  %s531 = smov 12
  %v532 = vld [vmem:[%s530] ss:$48 sm:%s531]
  %vm533 = vcmask 1043458
  %v534 = vsel %vm533, %v532, %v529
  %s535 = scalar_lea.vmem %s0, 199
  %v536 = vld [vmem:[%s535] sm:$0x10]
  %vm537 = vcmask 1044484
  %v538 = vsel %vm537, %v536, %v534
  %539 = vrot.lane.b32.xlu0 %v538, 33
  %v540 = vpop.permute.xlu0 %539
  %vm541 = vcmask 294152
  %542 = vst.msk [vmem:[%s1] sm:$0x1f] %vm541, %v540
  %s543 = scalar_lea.vmem %s0, 10
  %s544 = smov 3
  %v545 = vld [vmem:[%s543] ss:$48 sm:%s544]
  %s546 = scalar_lea.vmem %s0, 10
  %s547 = smov 12
  %v548 = vld [vmem:[%s546] ss:$48 sm:%s547]
  %vm549 = vcmask 1043458
  %v550 = vsel %vm549, %v548, %v545
  %s551 = scalar_lea.vmem %s0, 198
  %v552 = vld [vmem:[%s551] sm:$0x10]
  %vm553 = vcmask 1044484
  %v554 = vsel %vm553, %v552, %v550
  %555 = vrot.lane.b32.xlu0 %v554, 30
  %v556 = vpop.permute.xlu0 %555
  %vm557 = vcmask 269552
  %558 = vst.msk [vmem:[%s1] sm:$0x1f] %vm557, %v556
  %s559 = scalar_lea.vmem %s0, 9
  %s560 = smov 3
  %v561 = vld [vmem:[%s559] ss:$48 sm:%s560]
  %s562 = scalar_lea.vmem %s0, 9
  %s563 = smov 12
  %v564 = vld [vmem:[%s562] ss:$48 sm:%s563]
  %vm565 = vcmask 1043458
  %v566 = vsel %vm565, %v564, %v561
  %s567 = scalar_lea.vmem %s0, 197
  %v568 = vld [vmem:[%s567] sm:$0x10]
  %vm569 = vcmask 1044484
  %v570 = vsel %vm569, %v568, %v566
  %571 = vrot.lane.b32.xlu0 %v570, 27
  %v572 = vpop.permute.xlu0 %571
  %vm573 = vcmask 244952
  %574 = vst.msk [vmem:[%s1] sm:$0x1f] %vm573, %v572
  %s575 = scalar_lea.vmem %s0, 8
  %s576 = smov 3
  %v577 = vld [vmem:[%s575] ss:$48 sm:%s576]
  %s578 = scalar_lea.vmem %s0, 8
  %s579 = smov 12
  %v580 = vld [vmem:[%s578] ss:$48 sm:%s579]
  %vm581 = vcmask 1043458
  %v582 = vsel %vm581, %v580, %v577
  %s583 = scalar_lea.vmem %s0, 196
  %v584 = vld [vmem:[%s583] sm:$0x10]
  %vm585 = vcmask 1044484
  %v586 = vsel %vm585, %v584, %v582
  %587 = vrot.lane.b32.xlu0 %v586, 24
  %v588 = vpop.permute.xlu0 %587
  %vm589 = vcmask 220352
  %590 = vst.msk [vmem:[%s1] sm:$0x1f] %vm589, %v588
  %s591 = scalar_lea.vmem %s0, 7
  %s592 = smov 3
  %v593 = vld [vmem:[%s591] ss:$48 sm:%s592]
  %s594 = scalar_lea.vmem %s0, 7
  %s595 = smov 12
  %v596 = vld [vmem:[%s594] ss:$48 sm:%s595]
  %vm597 = vcmask 1043458
  %v598 = vsel %vm597, %v596, %v593
  %s599 = scalar_lea.vmem %s0, 195
  %v600 = vld [vmem:[%s599] sm:$0x10]
  %vm601 = vcmask 1044484
  %v602 = vsel %vm601, %v600, %v598
  %603 = vrot.lane.b32.xlu0 %v602, 21
  %v604 = vpop.permute.xlu0 %603
  %vm605 = vcmask 195752
  %606 = vst.msk [vmem:[%s1] sm:$0x1f] %vm605, %v604
  %s607 = scalar_lea.vmem %s0, 6
  %s608 = smov 3
  %v609 = vld [vmem:[%s607] ss:$48 sm:%s608]
  %s610 = scalar_lea.vmem %s0, 6
  %s611 = smov 12
  %v612 = vld [vmem:[%s610] ss:$48 sm:%s611]
  %vm613 = vcmask 1043458
  %v614 = vsel %vm613, %v612, %v609
  %s615 = scalar_lea.vmem %s0, 194
  %v616 = vld [vmem:[%s615] sm:$0x10]
  %vm617 = vcmask 1044484
  %v618 = vsel %vm617, %v616, %v614
  %619 = vrot.lane.b32.xlu0 %v618, 18
  %v620 = vpop.permute.xlu0 %619
  %vm621 = vcmask 171152
  %622 = vst.msk [vmem:[%s1] sm:$0x1f] %vm621, %v620
  %s623 = scalar_lea.vmem %s0, 5
  %s624 = smov 3
  %v625 = vld [vmem:[%s623] ss:$48 sm:%s624]
  %s626 = scalar_lea.vmem %s0, 5
  %s627 = smov 12
  %v628 = vld [vmem:[%s626] ss:$48 sm:%s627]
  %vm629 = vcmask 1043458
  %v630 = vsel %vm629, %v628, %v625
  %s631 = scalar_lea.vmem %s0, 193
  %v632 = vld [vmem:[%s631] sm:$0x10]
  %vm633 = vcmask 1044484
  %v634 = vsel %vm633, %v632, %v630
  %635 = vrot.lane.b32.xlu0 %v634, 15
  %v636 = vpop.permute.xlu0 %635
  %vm637 = vcmask 146552
  %638 = vst.msk [vmem:[%s1] sm:$0x1f] %vm637, %v636
  %s639 = scalar_lea.vmem %s0, 4
  %s640 = smov 3
  %v641 = vld [vmem:[%s639] ss:$48 sm:%s640]
  %s642 = scalar_lea.vmem %s0, 4
  %s643 = smov 12
  %v644 = vld [vmem:[%s642] ss:$48 sm:%s643]
  %vm645 = vcmask 1043458
  %v646 = vsel %vm645, %v644, %v641
  %s647 = scalar_lea.vmem %s0, 192
  %v648 = vld [vmem:[%s647] sm:$0x10]
  %vm649 = vcmask 1044484
  %v650 = vsel %vm649, %v648, %v646
  %651 = vrot.lane.b32.xlu0 %v650, 12
  %v652 = vpop.permute.xlu0 %651
  %vm653 = vcmask 121952
  %654 = vst.msk [vmem:[%s1] sm:$0x1f] %vm653, %v652
  %s655 = scalar_lea.vmem %s0, 3
  %s656 = smov 3
  %v657 = vld [vmem:[%s655] ss:$48 sm:%s656]
  %s658 = scalar_lea.vmem %s0, 3
  %s659 = smov 12
  %v660 = vld [vmem:[%s658] ss:$48 sm:%s659]
  %vm661 = vcmask 1043458
  %v662 = vsel %vm661, %v660, %v657
  %s663 = scalar_lea.vmem %s0, 191
  %v664 = vld [vmem:[%s663] sm:$0x10]
  %vm665 = vcmask 1044484
  %v666 = vsel %vm665, %v664, %v662
  %667 = vrot.lane.b32.xlu0 %v666, 9
  %v668 = vpop.permute.xlu0 %667
  %vm669 = vcmask 97352
  %670 = vst.msk [vmem:[%s1] sm:$0x1f] %vm669, %v668
  %s671 = scalar_lea.vmem %s0, 2
  %s672 = smov 3
  %v673 = vld [vmem:[%s671] ss:$48 sm:%s672]
  %s674 = scalar_lea.vmem %s0, 2
  %s675 = smov 12
  %v676 = vld [vmem:[%s674] ss:$48 sm:%s675]
  %vm677 = vcmask 1043458
  %v678 = vsel %vm677, %v676, %v673
  %s679 = scalar_lea.vmem %s0, 190
  %v680 = vld [vmem:[%s679] sm:$0x10]
  %vm681 = vcmask 1044484
  %v682 = vsel %vm681, %v680, %v678
  %683 = vrot.lane.b32.xlu0 %v682, 6
  %v684 = vpop.permute.xlu0 %683
  %vm685 = vcmask 72752
  %686 = vst.msk [vmem:[%s1] sm:$0x1f] %vm685, %v684
  %s687 = scalar_lea.vmem %s0, 1
  %s688 = smov 3
  %v689 = vld [vmem:[%s687] ss:$48 sm:%s688]
  %s690 = scalar_lea.vmem %s0, 1
  %s691 = smov 12
  %v692 = vld [vmem:[%s690] ss:$48 sm:%s691]
  %vm693 = vcmask 1043458
  %v694 = vsel %vm693, %v692, %v689
  %s695 = scalar_lea.vmem %s0, 189
  %v696 = vld [vmem:[%s695] sm:$0x10]
  %vm697 = vcmask 1044484
  %v698 = vsel %vm697, %v696, %v694
  %699 = vrot.lane.b32.xlu0 %v698, 3
  %v700 = vpop.permute.xlu0 %699
  %vm701 = vcmask 48152
  %702 = vst.msk [vmem:[%s1] sm:$0x1f] %vm701, %v700

// kernel: learnable_gaussian_smoothing.1
$region0: #{learnable_gaussian_smoothing.1}
  #allocation0 [shape = 'u32[]', space=smem, size = 0x4, offset = 0x4, fixed_abs, tag = 'smem constant byte address 0x4 - core index']
  #allocation1 [shape = 'u32[144,128]{1,0:T(1,128)}', space=vmem, size = 0x12000, scoped, tag = 'internal scratch']
  #allocation2 [shape = 'f32[8,384]{1,0:T(8,128)}', space=vmem, size = 0x3000, scoped, tag = 'scratch operand']
  %s0 = inlined_call_operand.vmem [shape: f32[2,48], index: 0, kind: input, shape index: {}]
  %s1 = inlined_call_operand.vmem [shape: f32[2,256], index: 1, kind: input, shape index: {}]
  %s2 = inlined_call_operand.vmem [shape: f32[5,128], index: 2, kind: input, shape index: {}]
  %s3 = inlined_call_operand.vmem [shape: f32[2,48], index: 3, kind: output, shape index: {}]
  %s4 = sld [smem:[#allocation0]]
  $region56: #{learnable_gaussian_smoothing.1} parent=0
    _
  %s6 = ssub.s32 1, %s4
  %s7 = scalar_select 0, %s6, %s4
  $region1: #{learnable_gaussian_smoothing.1} parent=0
    #allocation3 [shape = 'u8[4096]{0}', space=vmem, size = 0x1000, scoped, tag = 'output window, operand 0, single buffered']
    // Predicated region
    $region2: #{learnable_gaussian_smoothing.1} parent=1 // pred_check
      _
    $region3: #{learnable_gaussian_smoothing.1} parent=1 // pred_check_branch
      %9 = sbr.rel (0) target = $region5
    $region4: #{learnable_gaussian_smoothing.1} parent=1 // pred_region
      _
    $region5: #{learnable_gaussian_smoothing.1} parent=1 // pred_fallthru
      _
    // Predicated region
    $region6: #{learnable_gaussian_smoothing.1} parent=1 // pred_check
      _
    $region7: #{learnable_gaussian_smoothing.1} parent=1 // pred_check_branch
      %11 = sbr.rel (0) target = $region9
    $region8: #{learnable_gaussian_smoothing.1} parent=1 // pred_region
      _
    $region9: #{learnable_gaussian_smoothing.1} parent=1 // pred_fallthru
      _
    // Predicated region
    $region10: #{learnable_gaussian_smoothing.1} parent=1 // pred_check
      _
    $region11: #{learnable_gaussian_smoothing.1} parent=1 // pred_check_branch
      %13 = sbr.rel (0) target = $region13
    $region12: #{learnable_gaussian_smoothing.1} parent=1 // pred_region
      _
    $region13: #{learnable_gaussian_smoothing.1} parent=1 // pred_fallthru
      _
    %v14 = vld [vmem:[%s1] sm:$0x3]
    %v15 = vld [vmem:[%s1 + $0x4] sm:$0x3]
    %v16 = vld [vmem:[%s1 + $0x8] sm:$0x3]
    %v17 = vld [vmem:[%s1 + $0xc] sm:$0x3]
    %v22 = vcombine.low %v14, %v15
    %v23 = vcombine.low %v16, %v17
    %v25 = vunpack.c.l.s4 1983009808
    %v26 = vunpack.c.0.s8 %v25
    %v27 = vlaneseq
    %v28 = vshrl.u32 %v27, 7
    %v29 = vsub.s32 %v26, %v28
    %v30 = vrot.slane %v22, %v29
    %v32 = vunpack.c.l.s4 1983009808
    %v33 = vunpack.c.0.s8 %v32
    %v34 = vlaneseq
    %v35 = vshrl.u32 %v34, 7
    %v36 = vsub.s32 %v33, %v35
    %v37 = vrot.slane %v23, %v36
    %v38 = vcombine.low %v30, %v37
    %40 = vst [vmem:[#allocation2] sm:$0xff] %v38
    %v41 = vld [vmem:[%s0] sm:$0xff]
    %42 = vst [vmem:[#allocation2 + $0x8] sm:$0xff] %v41
    %v43 = vld [vmem:[%s1 + $0x2] sm:$0x3]
    %v44 = vld [vmem:[%s1 + $0x6] sm:$0x3]
    %v45 = vld [vmem:[%s1 + $0xa] sm:$0x3]
    %v46 = vld [vmem:[%s1 + $0xe] sm:$0x3]
    %v51 = vcombine.low %v43, %v44
    %v52 = vcombine.low %v45, %v46
    %v54 = vunpack.c.l.s4 1983009808
    %v55 = vunpack.c.0.s8 %v54
    %v56 = vlaneseq
    %v57 = vshrl.u32 %v56, 7
    %v58 = vsub.s32 %v55, %v57
    %v59 = vrot.slane %v51, %v58
    %v61 = vunpack.c.l.s4 1983009808
    %v62 = vunpack.c.0.s8 %v61
    %v63 = vlaneseq
    %v64 = vshrl.u32 %v63, 7
    %v65 = vsub.s32 %v62, %v64
    %v66 = vrot.slane %v52, %v65
    %v67 = vcombine.low %v59, %v66
    %69 = vst [vmem:[#allocation2 + $0x10] sm:$0xff] %v67
    %p70 = scmp.eq.s32.totalorder 0, 0
    // Predicated region
    $region14: #{learnable_gaussian_smoothing.1} parent=1 // pred_check
      %p71 = pneg %p70
    $region15: #{learnable_gaussian_smoothing.1} parent=1 // pred_check_branch
      %73 = sbr.rel (%p71) target = $region17
    $region16: #{learnable_gaussian_smoothing.1} parent=1 // pred_region
      %vm74 = vcmask 441728
      %75 = vst.msk [vmem:[#allocation2 + $0x8] sm:$0xff] %vm74, 0.0
    $region17: #{learnable_gaussian_smoothing.1} parent=1 // pred_fallthru
      _
    %v76 = vld [vmem:[%s2] sm:$0x1]
    %v77 = vld [vmem:[#allocation2] sm:$0xff]
    %v78 = vld [vmem:[#allocation2 + $0x8] sm:$0xff]
    %v79 = vlaneseq
    %v80 = vshrl.u32 %v79, 7
    %v81 = vsub.s32 0, %v80
    %v82 = vrot.slane %v76, %v81
    %85 = vrot.lane.b32.xlu0 %v77, 6
    %v86 = vpop.permute.xlu0 %85
    %87 = vrot.lane.b32.xlu0 %v78, 6
    %v88 = vpop.permute.xlu0 %87
    %vm89 = vcmask 48128
    %v90 = vsel %vm89, %v86, %v88
    %v92 = vmul.f32 %v82, %v90
    %v93 = vld [vmem:[%s2 + $0x1] sm:$0x1]
    %v94 = vlaneseq
    %v95 = vshrl.u32 %v94, 7
    %v96 = vsub.s32 0, %v95
    %v97 = vrot.slane %v93, %v96
    %98 = vrot.lane.b32.xlu0 %v77, 3
    %v99 = vpop.permute.xlu0 %98
    %100 = vrot.lane.b32.xlu0 %v78, 3
    %v101 = vpop.permute.xlu0 %100
    %vm102 = vcmask 23552
    %v103 = vsel %vm102, %v99, %v101
    %v105 = vmul.f32 %v97, %v103
    %v106 = vadd.f32 %v92, %v105
    %v107 = vld [vmem:[%s2 + $0x2] sm:$0x1]
    %v108 = vlaneseq
    %v109 = vshrl.u32 %v108, 7
    %v110 = vsub.s32 0, %v109
    %v111 = vrot.slane %v107, %v110
    %v112 = vmul.f32 %v111, %v78
    %v113 = vadd.f32 %v106, %v112
    %v114 = vld [vmem:[%s2 + $0x3] sm:$0x1]
    %v115 = vld [vmem:[#allocation2 + $0x8] sm:$0xff]
    %v116 = vld [vmem:[#allocation2 + $0x10] sm:$0xff]
    %v117 = vlaneseq
    %v118 = vshrl.u32 %v117, 7
    %v119 = vsub.s32 0, %v118
    %v120 = vrot.slane %v114, %v119
    %123 = vrot.lane.b32.xlu0 %v115, 125
    %v124 = vpop.permute.xlu0 %123
    %125 = vrot.lane.b32.xlu0 %v116, 125
    %v126 = vpop.permute.xlu0 %125
    %vm127 = vcmask 1022976
    %v128 = vsel %vm127, %v124, %v126
    %v130 = vmul.f32 %v120, %v128
    %v131 = vadd.f32 %v113, %v130
    %v132 = vld [vmem:[%s2 + $0x4] sm:$0x1]
    %v133 = vlaneseq
    %v134 = vshrl.u32 %v133, 7
    %v135 = vsub.s32 0, %v134
    %v136 = vrot.slane %v132, %v135
    %137 = vrot.lane.b32.xlu0 %v115, 122
    %v138 = vpop.permute.xlu0 %137
    %139 = vrot.lane.b32.xlu0 %v116, 122
    %v140 = vpop.permute.xlu0 %139
    %vm141 = vcmask 998400
    %v142 = vsel %vm141, %v138, %v140
    %v144 = vmul.f32 %v136, %v142
    %v145 = vadd.f32 %v131, %v144
    %146 = vst [vmem:[#allocation3] sm:$0xff] %v145
    // Predicated region
    $region18: #{learnable_gaussian_smoothing.1} parent=1 // pred_check
      _
    $region19: #{learnable_gaussian_smoothing.1} parent=1 // pred_check_branch
      %148 = sbr.rel (0) target = $region21
    $region20: #{learnable_gaussian_smoothing.1} parent=1 // pred_region
      // Predicated region
      $region22: #{learnable_gaussian_smoothing.1} parent=20 // pred_check
        _
      $region23: #{learnable_gaussian_smoothing.1} parent=20 // pred_check_branch
        %150 = sbr.rel (0) target = $region25
      $region24: #{learnable_gaussian_smoothing.1} parent=20 // pred_region
        // Predicated region
        $region26: #{learnable_gaussian_smoothing.1} parent=24 // pred_check
          _
        $region27: #{learnable_gaussian_smoothing.1} parent=24 // pred_check_branch
          %152 = sbr.rel target = $region29
        $region28: #{learnable_gaussian_smoothing.1} parent=24 // pred_region
          // Predicated region
          $region41: #{learnable_gaussian_smoothing.1} parent=28 // pred_check
            _
          $region42: #{learnable_gaussian_smoothing.1} parent=28 // pred_check_branch
            %168 = sbr.rel (0) target = $region44
          $region43: #{learnable_gaussian_smoothing.1} parent=28 // pred_region
            %s170 = ssub.s32 4, 1
            loop: start=0, step=1, limit=1
            $region45: #{learnable_gaussian_smoothing.1} parent=43 // loop_pre_header
              _
            $region46: #{learnable_gaussian_smoothing.1} parent=43 // loop_header
              %s172 = sphi 0, %s176
              %p173 = scmp.ge.s32.totalorder %s172, 1
              %s177 = sphi [#allocation3], [#allocation3]
              %s178 = sphi %s3, %s3
            $region47: #{learnable_gaussian_smoothing.1} parent=43 // loop_header_branch
              %175 = sbr.rel (%p173) target = $region51
            $region48: #{learnable_gaussian_smoothing.1} parent=43 // loop_body
              %v179 = vld [vmem:[%s177] sm:%s170]
              %180 = vst [vmem:[%s178] sm:%s170] %v179
            $region49: #{learnable_gaussian_smoothing.1} parent=43 // loop_footer
              %s176 = sadd.s32 1, %s172
            $region50: #{learnable_gaussian_smoothing.1} parent=43 // loop_footer_branch
              %171 = sbr.rel target = $region46
            $region51: #{learnable_gaussian_smoothing.1} parent=43 // loop_exit
              _
          $region44: #{learnable_gaussian_smoothing.1} parent=28 // pred_fallthru
            _
        $region29: #{learnable_gaussian_smoothing.1} parent=24 // pred_fallthru
          _
        // Predicated region
        $region30: #{learnable_gaussian_smoothing.1} parent=24 // pred_check
          _
        $region31: #{learnable_gaussian_smoothing.1} parent=24 // pred_check_branch
          %154 = sbr.rel (0) target = $region33
        $region32: #{learnable_gaussian_smoothing.1} parent=24 // pred_region
          %s156 = ssub.s32 4, 1
          loop: start=0, step=1, limit=1
          $region34: #{learnable_gaussian_smoothing.1} parent=32 // loop_pre_header
            _
          $region35: #{learnable_gaussian_smoothing.1} parent=32 // loop_header
            %s158 = sphi 0, %s162
            %p159 = scmp.ge.s32.totalorder %s158, 1
            %s163 = sphi [#allocation3], [#allocation3]
            %s164 = sphi %s3, %s3
          $region36: #{learnable_gaussian_smoothing.1} parent=32 // loop_header_branch
            %161 = sbr.rel (%p159) target = $region40
          $region37: #{learnable_gaussian_smoothing.1} parent=32 // loop_body
            %v165 = vld [vmem:[%s163] sm:%s156]
            %166 = vst [vmem:[%s164] sm:%s156] %v165
          $region38: #{learnable_gaussian_smoothing.1} parent=32 // loop_footer
            %s162 = sadd.s32 1, %s158
          $region39: #{learnable_gaussian_smoothing.1} parent=32 // loop_footer_branch
            %157 = sbr.rel target = $region35
          $region40: #{learnable_gaussian_smoothing.1} parent=32 // loop_exit
            _
        $region33: #{learnable_gaussian_smoothing.1} parent=24 // pred_fallthru
          _
      $region25: #{learnable_gaussian_smoothing.1} parent=20 // pred_fallthru
        _
      %181 = vnop
    $region21: #{learnable_gaussian_smoothing.1} parent=1 // pred_fallthru
      _
    // Predicated region
    $region52: #{learnable_gaussian_smoothing.1} parent=1 // pred_check
      _
    $region53: #{learnable_gaussian_smoothing.1} parent=1 // pred_check_branch
      %183 = sbr.rel (0) target = $region55
    $region54: #{learnable_gaussian_smoothing.1} parent=1 // pred_region
      _
    $region55: #{learnable_gaussian_smoothing.1} parent=1 // pred_fallthru
      _

</llo_original>
